<compile_context>
chip_gen: v7x
topology: tpu7x:2x2x1
jax: 0.10.0
libtpu: 0.0.40
codegen_flags: <defaults>
</compile_context>

<pallas_src>
import jax
import jax.numpy as jnp
from jax import lax
from jax.experimental import pallas as pl
from jax.experimental.pallas import tpu as pltpu


# Max tile sizes (f32). Double-buffered x/w tiles + output + accumulator stay
# around ~3 MiB, safe for v7x's smaller VMEM and comfortably inside the
# default scoped VMEM limit on v5e/v6e, while big enough to amortize the
# ~0.35 us per-grid-step overhead.
_TM_MAX = 256
_TN_MAX = 256
_TK_MAX = 512


def _round_up(x, m):
    return (x + m - 1) // m * m


def _linear_kernel(x_ref, w_ref, b_ref, o_ref, acc_ref):
    """One (TM, TN) output tile, accumulated over the K grid axis.

    x_ref:   [TM, TK]       activations
    w_ref:   [TN, TK]       weight in PyTorch (out, in) layout -- no transpose
    b_ref:   [1, TN]        bias
    o_ref:   [TM, TN]       output tile
    acc_ref: [TM, TN] f32   VMEM accumulator scratch
    """
    k = pl.program_id(2)

    @pl.when(k == 0)
    def _():
        acc_ref[...] = jnp.zeros_like(acc_ref)

    # Contract x's last dim with w's last dim: (TM,TK) x (TN,TK) -> (TM,TN).
    acc_ref[...] += lax.dot_general(
        x_ref[...],
        w_ref[...],
        dimension_numbers=(((1,), (1,)), ((), ())),
        preferred_element_type=jnp.float32,
    )

    @pl.when(k == pl.num_programs(2) - 1)
    def _():
        # Bias add + cast only in the epilogue; arithmetic stays in f32 and we
        # cast once on the final store (keeps v5e free of bf16 VPU math).
        o_ref[...] = (acc_ref[...] + b_ref[...].astype(jnp.float32)).astype(
            o_ref.dtype
        )


def pair_loss_2d_to_3d(x, weight, bias):
    """Pallas equivalent of PairLoss2Dto3D.forward == F.linear(x, weight, bias).

    x:      [..., input_size]
    weight: [output_size, input_size]   (PyTorch nn.Linear layout, NOT transposed)
    bias:   [output_size]
    returns [..., output_size]
    """
    K = x.shape[-1]
    N = weight.shape[0]
    lead = x.shape[:-1]

    x2d = x.reshape(-1, K)
    M = x2d.shape[0]

    # Tile = whole dim if it fits one tile (valid block shape: equals the full
    # array dim), otherwise the max tile size + zero padding to a multiple.
    TM = M if M <= _TM_MAX else _TM_MAX
    TN = N if N <= _TN_MAX else _TN_MAX
    TK = K if K <= _TK_MAX else _TK_MAX

    M_pad = _round_up(M, TM)
    N_pad = _round_up(N, TN)
    K_pad = _round_up(K, TK)

    if M_pad != M or K_pad != K:
        x2d = jnp.pad(x2d, ((0, M_pad - M), (0, K_pad - K)))
    w = weight
    if N_pad != N or K_pad != K:
        w = jnp.pad(w, ((0, N_pad - N), (0, K_pad - K)))
    b2d = bias.reshape(1, N)
    if N_pad != N:
        b2d = jnp.pad(b2d, ((0, 0), (0, N_pad - N)))

    grid = (M_pad // TM, N_pad // TN, K_pad // TK)

    itemsize = jnp.dtype(x.dtype).itemsize
    cost = pl.CostEstimate(
        flops=2 * M_pad * N_pad * K_pad,
        bytes_accessed=itemsize * (M_pad * K_pad + K_pad * N_pad + M_pad * N_pad),
        transcendentals=0,
    )

    y2d = pl.pallas_call(
        _linear_kernel,
        out_shape=jax.ShapeDtypeStruct((M_pad, N_pad), x.dtype),
        grid=grid,
        in_specs=[
            pl.BlockSpec((TM, TK), lambda i, j, k: (i, k)),   # x tile
            pl.BlockSpec((TN, TK), lambda i, j, k: (j, k)),   # weight tile [N,K]
            pl.BlockSpec((1, TN), lambda i, j, k: (0, j)),    # bias tile
        ],
        out_specs=pl.BlockSpec((TM, TN), lambda i, j, k: (i, j)),
        scratch_shapes=[pltpu.VMEM((TM, TN), jnp.float32)],
        compiler_params=pltpu.CompilerParams(
            dimension_semantics=("parallel", "parallel", "arbitrary"),
        ),
        cost_estimate=cost,
    )(x2d, w, b2d)

    if M_pad != M or N_pad != N:
        y2d = y2d[:M, :N]
    return y2d.reshape(*lead, N)


if __name__ == "__main__":
    # Small shapes consistent with the module: batch=2, seq=8,
    # input_size=32, output_size=128.
    input_size = 32
    output_size = 128

    key = jax.random.PRNGKey(0)
    kx, kw, kb = jax.random.split(key, 3)

    # Deterministic param init (mimics nn.Linear uniform(-1/sqrt(K), 1/sqrt(K))).
    bound = 1.0 / (input_size ** 0.5)
    weight = jax.random.uniform(kw, (output_size, input_size),
                                dtype=jnp.float32, minval=-bound, maxval=bound)
    bias = jax.random.uniform(kb, (output_size,),
                              dtype=jnp.float32, minval=-bound, maxval=bound)

    x = jax.random.normal(kx, (2, 8, input_size), dtype=jnp.float32)

    y = pair_loss_2d_to_3d(x, weight, bias)
    jax.block_until_ready(y)

    # Correctness check against plain JAX reference of F.linear.
    y_ref = jnp.einsum("bsk,nk->bsn", x, weight) + bias
    assert y.shape == (2, 8, output_size)
    assert jnp.allclose(y, y_ref, atol=1e-5, rtol=1e-5)

    print("KERNEL_OK")
</pallas_src>

<mosaic_0001>
module attributes {stable_mosaic.version = 11 : i64} {
  func.func @_linear_kernel(%arg0: i32, %arg1: i32, %arg2: i32, %arg3: memref<16x32xf32, #tpu.memory_space<vmem>>, %arg4: memref<128x32xf32, #tpu.memory_space<vmem>>, %arg5: memref<1x128xf32, #tpu.memory_space<vmem>>, %arg6: memref<16x128xf32, #tpu.memory_space<vmem>>, %arg7: memref<16x128xf32, #tpu.memory_space<vmem>>) attributes {dimension_semantics = [#tpu.dimension_semantics<parallel>, #tpu.dimension_semantics<parallel>, #tpu.dimension_semantics<arbitrary>], iteration_bounds = array<i64: 1, 1, 1>, scalar_prefetch = 0 : i64, scratch_operands = 1 : i64, tpu.core_type = #tpu.core_type<tc>, window_params = [{transform_indices = @transform_0, window_bounds = array<i64: 16, 32>}, {transform_indices = @transform_1, window_bounds = array<i64: 128, 32>}, {transform_indices = @transform_2, window_bounds = array<i64: 1, 128>}, {transform_indices = @transform_3, window_bounds = array<i64: 16, 128>}]} {
    %c0_i32 = arith.constant 0 : i32
    %0 = arith.cmpi eq, %arg2, %c0_i32 : i32
    %1 = arith.extui %0 : i1 to i32
    %c0_i32_0 = arith.constant 0 : i32
    %2 = arith.cmpi ne, %1, %c0_i32_0 : i32
    scf.if %2 {
      %cst_10 = arith.constant 0.000000e+00 : f32
      %12 = vector.broadcast %cst_10 : f32 to vector<16x128xf32>
      %c0_11 = arith.constant 0 : index
      %c0_12 = arith.constant 0 : index
      %13 = vector.load %arg7[%c0_11, %c0_12] : memref<16x128xf32, #tpu.memory_space<vmem>>, vector<16x128xf32>
      tpu.vector_store %arg7[%c0_11, %c0_12], %12 {strides = array<i32>} : memref<16x128xf32, #tpu.memory_space<vmem>>, vector<16x128xf32>,
    } else {
    }
    %c0 = arith.constant 0 : index
    %c0_1 = arith.constant 0 : index
    %3 = vector.load %arg7[%c0, %c0_1] : memref<16x128xf32, #tpu.memory_space<vmem>>, vector<16x128xf32>
    %c0_2 = arith.constant 0 : index
    %c0_3 = arith.constant 0 : index
    %4 = vector.load %arg3[%c0_2, %c0_3] : memref<16x32xf32, #tpu.memory_space<vmem>>, vector<16x32xf32>
    %c0_4 = arith.constant 0 : index
    %c0_5 = arith.constant 0 : index
    %5 = vector.load %arg4[%c0_4, %c0_5] : memref<128x32xf32, #tpu.memory_space<vmem>>, vector<128x32xf32>
    %cst = arith.constant dense<0.000000e+00> : vector<16x128xf32>
    %6 = tpu.matmul %4, %5, %cst {dimension_numbers = #tpu.dot_dimension_numbers<[1], [1], [0], [0], [0, 0, 1, 0], [], []>} : vector<16x32xf32>, vector<128x32xf32>, vector<16x128xf32> -> vector<16x128xf32>
    %7 = arith.addf %3, %6 : vector<16x128xf32>
    %c0_6 = arith.constant 0 : index
    %c0_7 = arith.constant 0 : index
    %8 = vector.load %arg7[%c0_6, %c0_7] : memref<16x128xf32, #tpu.memory_space<vmem>>, vector<16x128xf32>
    tpu.vector_store %arg7[%c0_6, %c0_7], %7 {strides = array<i32>} : memref<16x128xf32, #tpu.memory_space<vmem>>, vector<16x128xf32>,
    %c0_i32_8 = arith.constant 0 : i32
    %9 = arith.cmpi eq, %arg2, %c0_i32_8 : i32
    %10 = arith.extui %9 : i1 to i32
    %c0_i32_9 = arith.constant 0 : i32
    %11 = arith.cmpi ne, %10, %c0_i32_9 : i32
    scf.if %11 {
      %c0_10 = arith.constant 0 : index
      %c0_11 = arith.constant 0 : index
      %12 = vector.load %arg7[%c0_10, %c0_11] : memref<16x128xf32, #tpu.memory_space<vmem>>, vector<16x128xf32>
      %c0_12 = arith.constant 0 : index
      %c0_13 = arith.constant 0 : index
      %13 = vector.load %arg5[%c0_12, %c0_13] : memref<1x128xf32, #tpu.memory_space<vmem>>, vector<1x128xf32>
      %14 = vector.broadcast %13 : vector<1x128xf32> to vector<16x128xf32>
      %15 = arith.addf %12, %14 : vector<16x128xf32>
      %c0_14 = arith.constant 0 : index
      %c0_15 = arith.constant 0 : index
      %16 = vector.load %arg6[%c0_14, %c0_15] : memref<16x128xf32, #tpu.memory_space<vmem>>, vector<16x128xf32>
      tpu.vector_store %arg6[%c0_14, %c0_15], %15 {strides = array<i32>} : memref<16x128xf32, #tpu.memory_space<vmem>>, vector<16x128xf32>,
    } else {
    }
    return
  }
  func.func @transform_0(%arg0: i32, %arg1: i32, %arg2: i32) -> (i32, i32) {
    %c0_i32 = arith.constant 0 : i32
    return %arg0, %arg2 : i32, i32
  }
  func.func @transform_1(%arg0: i32, %arg1: i32, %arg2: i32) -> (i32, i32) {
    %c0_i32 = arith.constant 0 : i32
    return %arg1, %arg2 : i32, i32
  }
  func.func @transform_2(%arg0: i32, %arg1: i32, %arg2: i32) -> (i32, i32) {
    %c0_i32 = arith.constant 0 : i32
    %c0_i32_0 = arith.constant 0 : i32
    return %c0_i32, %arg1 : i32, i32
  }
  func.func @transform_3(%arg0: i32, %arg1: i32, %arg2: i32) -> (i32, i32) {
    %c0_i32 = arith.constant 0 : i32
    return %arg0, %arg1 : i32, i32
  }
}

</mosaic_0001>

<llo_original>
// kernel: tpu_custom_call.1
$region0: #{tpu_custom_call.1}
  #allocation0 [shape = 'u32[]', space=smem, size = 0x4, offset = 0x4, fixed_abs, tag = 'smem constant byte address 0x4 - core index']
  #allocation1 [shape = 'u32[144,128]{1,0:T(1,128)}', space=vmem, size = 0x12000, scoped, tag = 'internal scratch']
  #allocation2 [shape = 'f32[16,128]{1,0:T(8,128)}', space=vmem, size = 0x2000, scoped, tag = 'scratch operand']
  %s0 = inlined_call_operand.vmem [shape: f32[16,32], index: 0, kind: input, shape index: {}]
  %s1 = inlined_call_operand.vmem [shape: f32[128,32], index: 1, kind: input, shape index: {}]
  %s2 = inlined_call_operand.vmem [shape: f32[1,128], index: 2, kind: input, shape index: {}]
  %s3 = inlined_call_operand.hbm [shape: f32[16,128], index: 3, kind: output, shape index: {}]
  %s4 = sld [smem:[#allocation0]]
  $region30: #{tpu_custom_call.1} parent=0
    _
  %s6 = ssub.s32 1, %s4
  %s7 = scalar_select 0, %s6, %s4
  $region1: #{tpu_custom_call.1} parent=0
    #allocation3 [shape = 'u8[8192]{0}', space=vmem, size = 0x2000, scoped, tag = 'output window, operand 0, single buffered']
    #allocation4 [shape = 's32[1]{0}', space=sflag, size = 0x4, scoped, tag = 'scoped memory for tpu_custom_call.1']
    %8 = vsyncpa [#allocation4], 0
    // Predicated region
    $region2: #{tpu_custom_call.1} parent=1 // pred_check
      _
    $region3: #{tpu_custom_call.1} parent=1 // pred_check_branch
      %10 = sbr.rel (0) target = $region5
    $region4: #{tpu_custom_call.1} parent=1 // pred_region
      _
    $region5: #{tpu_custom_call.1} parent=1 // pred_fallthru
      _
    // Predicated region
    $region6: #{tpu_custom_call.1} parent=1 // pred_check
      _
    $region7: #{tpu_custom_call.1} parent=1 // pred_check_branch
      %12 = sbr.rel (0) target = $region9
    $region8: #{tpu_custom_call.1} parent=1 // pred_region
      _
    $region9: #{tpu_custom_call.1} parent=1 // pred_fallthru
      _
    // Predicated region
    $region10: #{tpu_custom_call.1} parent=1 // pred_check
      _
    $region11: #{tpu_custom_call.1} parent=1 // pred_check_branch
      %14 = sbr.rel (0) target = $region13
    $region12: #{tpu_custom_call.1} parent=1 // pred_region
      _
    $region13: #{tpu_custom_call.1} parent=1 // pred_fallthru
      _
    %p15 = scmp.eq.s32.totalorder 0, 0
    // Predicated region
    $region14: #{tpu_custom_call.1} parent=1 // pred_check
      %p16 = pneg %p15
    $region15: #{tpu_custom_call.1} parent=1 // pred_check_branch
      %18 = sbr.rel (%p16) target = $region17
    $region16: #{tpu_custom_call.1} parent=1 // pred_region
      %19 = vst [vmem:[#allocation2] sm:$0xff] 0.0
      %20 = vst [vmem:[#allocation2 + $0x8] sm:$0xff] 0.0
    $region17: #{tpu_custom_call.1} parent=1 // pred_fallthru
      _
    %v21 = vld [vmem:[#allocation2] sm:$0xff]
    %v22 = vld [vmem:[#allocation2 + $0x8] sm:$0xff]
    %v23 = vld [vmem:[%s0] sm:$0xff]
    %v24 = vld [vmem:[%s0 + $0x8] sm:$0xff]
    %v25 = vld [vmem:[%s1] sm:$0xff]
    %v26 = vld [vmem:[%s1 + $0x8] sm:$0xff]
    %v27 = vld [vmem:[%s1 + $0x10] sm:$0xff]
    %v28 = vld [vmem:[%s1 + $0x18] sm:$0xff]
    %v29 = vld [vmem:[%s1 + $0x20] sm:$0xff]
    %v30 = vld [vmem:[%s1 + $0x28] sm:$0xff]
    %v31 = vld [vmem:[%s1 + $0x30] sm:$0xff]
    %v32 = vld [vmem:[%s1 + $0x38] sm:$0xff]
    %v33 = vld [vmem:[%s1 + $0x40] sm:$0xff]
    %v34 = vld [vmem:[%s1 + $0x48] sm:$0xff]
    %v35 = vld [vmem:[%s1 + $0x50] sm:$0xff]
    %v36 = vld [vmem:[%s1 + $0x58] sm:$0xff]
    %v37 = vld [vmem:[%s1 + $0x60] sm:$0xff]
    %v38 = vld [vmem:[%s1 + $0x68] sm:$0xff]
    %v39 = vld [vmem:[%s1 + $0x70] sm:$0xff]
    %v40 = vld [vmem:[%s1 + $0x78] sm:$0xff]
    %vm41 = vcmask 261120
    %v43 = vsel %vm41, %v23, 0
    %v46 = vsel %vm41, %v24, 0
    %v49 = vsel %vm41, %v25, 0
    %v52 = vsel %vm41, %v26, 0
    %v55 = vsel %vm41, %v27, 0
    %v58 = vsel %vm41, %v28, 0
    %v61 = vsel %vm41, %v29, 0
    %v64 = vsel %vm41, %v30, 0
    %v67 = vsel %vm41, %v31, 0
    %v70 = vsel %vm41, %v32, 0
    %v73 = vsel %vm41, %v33, 0
    %v76 = vsel %vm41, %v34, 0
    %v79 = vsel %vm41, %v35, 0
    %v82 = vsel %vm41, %v36, 0
    %v85 = vsel %vm41, %v37, 0
    %v88 = vsel %vm41, %v38, 0
    %v91 = vsel %vm41, %v39, 0
    %v94 = vsel %vm41, %v40, 0
    %96 = vmatprep.subr.mxu0 0.0
    %97 = vmatpush1.xpose.msra.mxu0 %v49
    %98 = vmatprep.subr.mxu0 0.0
    %99 = vmatpush1.xpose.msra.mxu0 %v52
    %100 = vmatprep.subr.mxu0 0.0
    %101 = vmatpush1.xpose.msra.mxu0 %v55
    %102 = vmatprep.subr.mxu0 0.0
    %103 = vmatpush1.xpose.msra.mxu0 %v58
    %104 = vmatprep.subr.mxu0 0.0
    %105 = vmatpush1.xpose.msra.mxu0 %v61
    %106 = vmatprep.subr.mxu0 0.0
    %107 = vmatpush1.xpose.msra.mxu0 %v64
    %108 = vmatprep.subr.mxu0 0.0
    %109 = vmatpush1.xpose.msra.mxu0 %v67
    %110 = vmatprep.subr.mxu0 0.0
    %111 = vmatpush1.xpose.msra.mxu0 %v70
    %112 = vmatprep.subr.mxu0 0.0
    %113 = vmatpush1.xpose.msra.mxu0 %v73
    %114 = vmatprep.subr.mxu0 0.0
    %115 = vmatpush1.xpose.msra.mxu0 %v76
    %116 = vmatprep.subr.mxu0 0.0
    %117 = vmatpush1.xpose.msra.mxu0 %v79
    %118 = vmatprep.subr.mxu0 0.0
    %119 = vmatpush1.xpose.msra.mxu0 %v82
    %120 = vmatprep.subr.mxu0 0.0
    %121 = vmatpush1.xpose.msra.mxu0 %v85
    %122 = vmatprep.subr.mxu0 0.0
    %123 = vmatpush1.xpose.msra.mxu0 %v88
    %124 = vmatprep.subr.mxu0 0.0
    %125 = vmatpush1.xpose.msra.mxu0 %v91
    %126 = vmatprep.subr.mxu0 0.0
    %127 = vmatpush1.xpose.msra.mxu0 %v94
    %128 = vmatprep.subr.mxu0 0.0
    %129 = vmatpush1.xpose.msra.mxu0 0.0
    %130 = vmatprep.subr.mxu0 0.0
    %131 = vmatpush1.xpose.msra.mxu0 0.0
    %132 = vmatprep.subr.mxu0 0.0
    %133 = vmatpush1.xpose.msra.mxu0 0.0
    %134 = vmatprep.subr.mxu0 0.0
    %135 = vmatpush1.xpose.msra.mxu0 0.0
    %136 = vmatprep.subr.mxu0 0.0
    %137 = vmatpush1.xpose.msra.mxu0 0.0
    %138 = vmatprep.subr.mxu0 0.0
    %139 = vmatpush1.xpose.msra.mxu0 0.0
    %140 = vmatprep.subr.mxu0 0.0
    %141 = vmatpush1.xpose.msra.mxu0 0.0
    %142 = vmatprep.subr.mxu0 0.0
    %143 = vmatpush1.xpose.msra.mxu0 0.0
    %144 = vmatprep.subr.mxu0 0.0
    %145 = vmatpush1.xpose.msra.mxu0 0.0
    %146 = vmatprep.subr.mxu0 0.0
    %147 = vmatpush1.xpose.msra.mxu0 0.0
    %148 = vmatprep.subr.mxu0 0.0
    %149 = vmatpush1.xpose.msra.mxu0 0.0
    %150 = vmatprep.subr.mxu0 0.0
    %151 = vmatpush1.xpose.msra.mxu0 0.0
    %152 = vmatprep.subr.mxu0 0.0
    %153 = vmatpush1.xpose.msra.mxu0 0.0
    %154 = vmatprep.subr.mxu0 0.0
    %155 = vmatpush1.xpose.msra.mxu0 0.0
    %156 = vmatprep.subr.mxu0 0.0
    %157 = vmatpush1.xpose.msra.mxu0 0.0
    %158 = vmatprep.subr.mxu0 0.0
    %159 = vmatpush1.xpose.msra.mxu0 0.0
    %160 = vmatprep.mubr.f32.mxu0 0.0
    %161 = vmatmul.mubr.f32.gmra.mrb[0].mxu0 %v43
    %v162 = vpop.f32.mrb[0].mxu0
    %v163 = vadd.f32 0.0, %v162
    %v164 = vpop.f32.mrb[0].mxu0
    %165 = vmatprep.mubr.f32.mxu0 0.0
    %166 = vmatmul.mubr.f32.gmra.mrb[0].mxu0 %v46
    %v167 = vpop.f32.mrb[0].mxu0
    %v168 = vadd.f32 0.0, %v167
    %v169 = vpop.f32.mrb[0].mxu0
    %170 = vdwg.mxu0
    %v171 = vadd.f32 %v21, %v163
    %v172 = vadd.f32 %v22, %v168
    %173 = vst [vmem:[#allocation2] sm:$0xff] %v171
    %174 = vst [vmem:[#allocation2 + $0x8] sm:$0xff] %v172
    // Predicated region
    $region18: #{tpu_custom_call.1} parent=1 // pred_check
      %p175 = pneg %p15
    $region19: #{tpu_custom_call.1} parent=1 // pred_check_branch
      %177 = sbr.rel (%p175) target = $region21
    $region20: #{tpu_custom_call.1} parent=1 // pred_region
      %v178 = vld [vmem:[#allocation2] sm:$0xff]
      %v179 = vld [vmem:[#allocation2 + $0x8] sm:$0xff]
      %v180 = vld [vmem:[%s2] sm:$0x1]
      %v182 = vlaneseq
      %v183 = vshrl.u32 %v182, 7
      %v184 = vsub.s32 0, %v183
      %v185 = vrot.slane %v180, %v184
      %v187 = vadd.f32 %v178, %v185
      %v188 = vadd.f32 %v179, %v185
      %189 = vst [vmem:[#allocation3] sm:$0xff] %v187
      %190 = vst [vmem:[#allocation3 + $0x8] sm:$0xff] %v188
    $region21: #{tpu_custom_call.1} parent=1 // pred_fallthru
      _
    // Predicated region
    $region22: #{tpu_custom_call.1} parent=1 // pred_check
      _
    $region23: #{tpu_custom_call.1} parent=1 // pred_check_branch
      %192 = sbr.rel (0) target = $region25
    $region24: #{tpu_custom_call.1} parent=1 // pred_region
      %s194 = ssub.s32 256, 256
      %195 = vsyncadd [#allocation4], %s194
      %s196 = sshll.u32 [#allocation3], 4
      %s197 = int_to_ptr.vmem [resolvable:$true] %s196
      %202 = dma.vmem_to_hbm [thread:$0]  %s197, 256, %s3, [#allocation4], 128, 128, 8
    $region25: #{tpu_custom_call.1} parent=1 // pred_fallthru
      _
    // Predicated region
    $region26: #{tpu_custom_call.1} parent=1 // pred_check
      _
    $region27: #{tpu_custom_call.1} parent=1 // pred_check_branch
      %204 = sbr.rel (0) target = $region29
    $region28: #{tpu_custom_call.1} parent=1 // pred_region
      %205 = dma.done [#allocation4], 256
    $region29: #{tpu_custom_call.1} parent=1 // pred_fallthru
      _
    %206 = vsyncpa [#allocation4], 1

</llo_original>
